<compile_context>
chip_gen: v7x
topology: tpu7x:2x2x1
jax: 0.10.0
libtpu: 0.0.40
codegen_flags: <defaults>
</compile_context>

<pallas_src>
import functools
import math

import jax
import jax.numpy as jnp
from jax.experimental import pallas as pl
from jax.experimental.pallas import tpu as pltpu


def _device_kind():
    try:
        return jax.devices()[0].device_kind.lower()
    except Exception:
        return ""


def _default_tanh_dtype():
    # bf16 EUP exists on v6e/v7x (packed, ~2x f32 rate); v5e & older: f32 only.
    kind = _device_kind()
    if "v6" in kind or "v7" in kind:
        return jnp.bfloat16
    return jnp.float32


def _choose_tile_rows(rows, max_rows, want_split):
    """Tile rows: multiple of 8 (unless it equals the full dim), capped by VMEM."""
    if rows > max_rows:
        return max_rows                      # multiple of 8; partial tail block is fine
    if want_split and rows >= 16:
        # v7x has 2 TensorCores: make sure the 1-D 'parallel' grid has >= 2 steps.
        return ((-(-rows // 2) + 7) // 8) * 8
    return rows                              # single block == full array dims


def _quant_kernel(params_ref, d_ref, h_ref, x_ref, o_ref, *,
                  n, training, scale_input, bf16_tanh):
    """Elementwise quantization-activation kernel.

    params_ref: SMEM (2,) f32 -- [c, base]
                  train: c = 0.5*T*beta, base = sum_k 0.5*alpha*scales[k]
                  eval : c = beta (general path) or unused (beta folded), base = 0
    d_ref:      SMEM (n,) f32 -- per-level thresholds/offsets
                  train: 0.5*T*biases[k]; eval: biases[k]/beta (or biases[k])
    h_ref:      SMEM (n,) f32 -- per-level heights
                  train: 0.5*alpha*scales[k]; eval: alpha*scales[k]
    x_ref:      VMEM (tr, LANES) tile of the flattened input (native dtype)
    o_ref:      VMEM (tr, LANES) tile of the output (native dtype)
    """
    x = x_ref[...].astype(jnp.float32)           # cheap VPU cast; DMA stays native dtype
    y = x * params_ref[0] if scale_input else x
    out = jnp.zeros_like(y)
    # n is a small static integer -> unrolled at trace time (pure VPU/EUP work).
    for k in range(n):
        d_k = d_ref[k]
        h_k = h_ref[k]
        if training:
            # sigmoid(z) = 0.5*tanh(z/2) + 0.5; clamp(+-10) on z becomes clamp(+-5)
            # on the halved argument. One EUP transcendental per level, no divide.
            t = jnp.clip(y - d_k, -5.0, 5.0)
            if bf16_tanh:
                t = t.astype(jnp.bfloat16)       # packed bf16 EUP on v6e/v7x
            out = out + h_k * jnp.tanh(t).astype(jnp.float32)
        else:
            # Hard step. Thresholds already include beta (fast path) -> raw compare.
            out = out + jnp.where(y > d_k, h_k, 0.0)
    if training:
        out = out + params_ref[1]                # folds the "+0.5 per level" constant
    o_ref[...] = out.astype(o_ref.dtype)


def quantization_forward(x, scales, biases, alpha, beta, *, T=1, training=True,
                         tanh_dtype=None):
    """Apply the Quantization activation to a tensor via a Pallas TPU kernel."""
    orig_shape = x.shape
    orig_dtype = x.dtype
    total = int(math.prod(orig_shape))

    n = int(scales.shape[0])
    scales = scales.astype(jnp.float32)
    biases = biases.astype(jnp.float32)
    alpha = jnp.asarray(alpha, jnp.float32)
    beta = jnp.asarray(beta, jnp.float32)
    Tf = float(T)

    # ---- fold constants so the kernel does the minimum per-element work ----
    if training:
        c = (0.5 * Tf) * beta
        d = (0.5 * Tf) * biases
        h = 0.5 * alpha * scales
        base = jnp.sum(h)
        scale_input = True
    else:
        h = alpha * scales
        base = jnp.float32(0.0)
        # Fold beta into the thresholds when it is a known positive constant so the
        # kernel compares the raw input directly (no per-element multiply / subtract).
        try:
            beta_pos = bool(beta > 0)
        except Exception:        # traced (e.g. under jit) -> general, always-correct path
            beta_pos = False
        if beta_pos:
            c = jnp.float32(1.0)
            d = biases / beta
            scale_input = False
        else:
            c = beta
            d = biases
            scale_input = True
    params = jnp.stack([c, base]).astype(jnp.float32)   # (2,) SMEM scalars

    if tanh_dtype is None:
        tanh_dtype = _default_tanh_dtype()
    bf16_tanh = bool(training) and (jnp.dtype(tanh_dtype) == jnp.dtype(jnp.bfloat16))

    # ---- lane-dense 2-D layout without extra HBM passes ----
    # Pick LANES = largest multiple-of-128 divisor of numel (<=1024) so the reshape
    # is a free metadata op; only truly ragged sizes fall back to a single zero-pad.
    LANES = None
    for cand in range(1024, 0, -128):
        if total % cand == 0:
            LANES = cand
            break
    x_flat = x.reshape(-1)
    padded_total = total
    if LANES is None:
        LANES = 128 if total <= 128 * 512 else 1024
        rows = -(-total // LANES)
        padded_total = rows * LANES
        x_flat = jnp.pad(x_flat, (0, padded_total - total))
    rows = padded_total // LANES
    x2d = x_flat.reshape(rows, LANES)

    # ---- generation-aware tile size ----
    kind = _device_kind()
    if "v7" in kind:
        # 3.2 TB/s HBM: bigger tiles amortize per-step overhead; 2x(4+4) MiB f32
        # double-buffered = 16 MiB, under the 32 MiB scoped default. Also keep the
        # grid >= 2 steps so both TensorCores are used.
        max_rows, want_split = 1024, True
    else:
        # v5e scoped-VMEM default is 16 MiB: keep the footprint at <= 8 MiB
        # (2x(2+2) MiB f32 double-buffered). Same size is ~85% of roofline on v6e.
        max_rows, want_split = 512, False
    tr = _choose_tile_rows(rows, max_rows, want_split)
    num_blocks = -(-rows // tr)

    # ---- advisory cost estimate for the XLA scheduler ----
    numel = rows * LANES
    if training:
        flops = numel * (1 + 4 * n)
        transcendentals = numel * n
    else:
        flops = numel * (2 * n)
        transcendentals = 0
    bytes_accessed = 2 * numel * jnp.dtype(orig_dtype).itemsize

    kernel = functools.partial(
        _quant_kernel, n=n, training=bool(training),
        scale_input=bool(scale_input), bf16_tanh=bf16_tanh)

    out2d = pl.pallas_call(
        kernel,
        out_shape=jax.ShapeDtypeStruct((rows, LANES), orig_dtype),
        grid_spec=pltpu.PrefetchScalarGridSpec(
            num_scalar_prefetch=0,
            grid=(num_blocks,),
            in_specs=[
                pl.BlockSpec(memory_space=pltpu.MemorySpace.SMEM),  # params (2,)
                pl.BlockSpec(memory_space=pltpu.MemorySpace.SMEM),  # d (n,)
                pl.BlockSpec(memory_space=pltpu.MemorySpace.SMEM),  # h (n,)
                pl.BlockSpec((tr, LANES), lambda i: (i, 0)),        # x tile (native dtype)
            ],
            out_specs=pl.BlockSpec((tr, LANES), lambda i: (i, 0)),
        ),
        compiler_params=pltpu.CompilerParams(
            dimension_semantics=("parallel",),
        ),
        cost_estimate=pl.CostEstimate(
            flops=int(flops),
            transcendentals=int(transcendentals),
            bytes_accessed=int(bytes_accessed),
        ),
    )(params, d, h, x2d)

    if padded_total != total:
        return out2d.reshape(-1)[:total].reshape(orig_shape)
    return out2d.reshape(orig_shape)


def quantization_reference(x, scales, biases, alpha, beta, *, T=1, training=True):
    """Pure-JAX reference matching the PyTorch forward (exp + divide form)."""
    xf = x.astype(jnp.float32) * beta
    out = jnp.zeros_like(xf)
    n = int(scales.shape[0])
    for k in range(n):
        if training:
            buf = jnp.clip(T * (xf - biases[k]), -10.0, 10.0)
            out = out + scales[k] / (1.0 + jnp.exp(-buf))
        else:
            out = out + jnp.where(xf - biases[k] > 0.0, scales[k], 0.0)
    return out * alpha


if __name__ == "__main__":
    # Deterministic synthetic parameter setup (mirrors Quantization.__init__ +
    # init_scale_and_offset + a deterministic stand-in for the lazy
    # params_cluster-based init of biases / alpha / beta).
    quant_values = [-4.0, -2.0, -1.0, 0.0, 1.0, 2.0, 4.0]
    n = len(quant_values) - 1
    # scales[i] = values[i+1] - values[i]
    scales = jnp.array(
        [quant_values[i + 1] - quant_values[i] for i in range(n)], dtype=jnp.float32)
    # TODO(synk): params_cluster (offline k-means-like bias search) has no clean
    # Pallas equivalent; biases are set deterministically to interval midpoints.
    biases = jnp.array(
        [(quant_values[i] + quant_values[i + 1]) / 2.0 for i in range(n)],
        dtype=jnp.float32)
    max_value = 2.0  # deterministic stand-in for the observed activation max
    beta = jnp.float32(quant_values[-1] / max_value)   # beta = values[-1] / max = 2.0
    alpha = jnp.float32(1.0 / beta)                    # alpha = 1 / beta = 0.5

    # Input: NCHW, small shape consistent with the module's (N, C, H, W) contract.
    key = jax.random.PRNGKey(0)
    x = jax.random.normal(key, (2, 4, 16, 16), dtype=jnp.float32)

    # 1) Training path (SigmoidT), exact f32 transcendentals.
    out_train = jax.block_until_ready(quantization_forward(
        x, scales, biases, alpha, beta, T=1, training=True, tanh_dtype=jnp.float32))
    ref_train = quantization_reference(x, scales, biases, alpha, beta, T=1, training=True)
    assert out_train.shape == x.shape and out_train.dtype == x.dtype
    assert jnp.allclose(out_train, ref_train, atol=1e-5, rtol=1e-5)

    # 2) Training path with auto transcendental dtype (bf16 tanh on v6e/v7x).
    out_train_fast = jax.block_until_ready(quantization_forward(
        x, scales, biases, alpha, beta, T=1, training=True))
    assert jnp.allclose(out_train_fast, ref_train, atol=5e-2, rtol=0.0)

    # 3) Eval path (hard step) with beta folded into the thresholds.
    out_eval = jax.block_until_ready(quantization_forward(
        x, scales, biases, alpha, beta, T=1, training=False))
    ref_eval = quantization_reference(x, scales, biases, alpha, beta, T=1, training=False)
    assert out_eval.shape == x.shape
    assert jnp.allclose(out_eval, ref_eval, atol=1e-5, rtol=1e-5)

    # 4) Native-dtype streaming: bf16 activations in, bf16 out.
    x_bf16 = x.astype(jnp.bfloat16)
    out_eval_bf = jax.block_until_ready(quantization_forward(
        x_bf16, scales, biases, alpha, beta, T=1, training=False))
    ref_eval_bf = quantization_reference(
        x_bf16.astype(jnp.float32), scales, biases, alpha, beta, T=1, training=False)
    assert out_eval_bf.dtype == jnp.bfloat16
    assert jnp.allclose(out_eval_bf.astype(jnp.float32), ref_eval_bf, atol=5e-2, rtol=0.0)

    # 5) Ragged shape -> zero-pad fallback path.
    x_r = jax.random.normal(jax.random.PRNGKey(1), (2, 3, 5, 7), dtype=jnp.float32)
    out_r = jax.block_until_ready(quantization_forward(
        x_r, scales, biases, alpha, beta, T=1, training=True, tanh_dtype=jnp.float32))
    ref_r = quantization_reference(x_r, scales, biases, alpha, beta, T=1, training=True)
    assert out_r.shape == x_r.shape
    assert jnp.allclose(out_r, ref_r, atol=1e-5, rtol=1e-5)

    print("KERNEL_OK")
</pallas_src>

<mosaic_0001>
module attributes {stable_mosaic.version = 11 : i64} {
  func.func @_quant_kernel(%arg0: i32, %arg1: memref<2xf32, #tpu.memory_space<smem>>, %arg2: memref<6xf32, #tpu.memory_space<smem>>, %arg3: memref<6xf32, #tpu.memory_space<smem>>, %arg4: memref<2x1024xf32, #tpu.memory_space<vmem>>, %arg5: memref<2x1024xf32, #tpu.memory_space<vmem>>) attributes {dimension_semantics = [#tpu.dimension_semantics<parallel>], iteration_bounds = array<i64: 1>, scalar_prefetch = 0 : i64, scratch_operands = 0 : i64, tpu.core_type = #tpu.core_type<tc>, window_params = [{transform_indices = @transform_0, window_bounds = array<i64: 2>}, {transform_indices = @transform_1, window_bounds = array<i64: 6>}, {transform_indices = @transform_2, window_bounds = array<i64: 6>}, {transform_indices = @transform_3, window_bounds = array<i64: 2, 1024>}, {transform_indices = @transform_4, window_bounds = array<i64: 2, 1024>}]} {
    %c0 = arith.constant 0 : index
    %c0_0 = arith.constant 0 : index
    %0 = vector.load %arg4[%c0, %c0_0] : memref<2x1024xf32, #tpu.memory_space<vmem>>, vector<2x1024xf32>
    %c0_1 = arith.constant 0 : index
    %1 = memref.load %arg1[%c0_1] : memref<2xf32, #tpu.memory_space<smem>>
    %2 = vector.broadcast %1 : f32 to vector<2x1024xf32>
    %3 = arith.mulf %0, %2 : vector<2x1024xf32>
    %cst = arith.constant 0.000000e+00 : f32
    %4 = vector.broadcast %cst : f32 to vector<2x1024xf32>
    %c0_2 = arith.constant 0 : index
    %5 = memref.load %arg2[%c0_2] : memref<6xf32, #tpu.memory_space<smem>>
    %c0_3 = arith.constant 0 : index
    %6 = memref.load %arg3[%c0_3] : memref<6xf32, #tpu.memory_space<smem>>
    %7 = vector.broadcast %5 : f32 to vector<2x1024xf32>
    %8 = arith.subf %3, %7 : vector<2x1024xf32>
    %cst_4 = arith.constant -5.000000e+00 : f32
    %cst_5 = arith.constant 5.000000e+00 : f32
    %9 = vector.broadcast %cst_4 : f32 to vector<2x1024xf32>
    %10 = arith.maximumf %9, %8 : vector<2x1024xf32>
    %11 = vector.broadcast %cst_5 : f32 to vector<2x1024xf32>
    %12 = arith.minimumf %11, %10 : vector<2x1024xf32>
    %13 = math.tanh %12 : vector<2x1024xf32>
    %14 = vector.broadcast %6 : f32 to vector<2x1024xf32>
    %15 = arith.mulf %14, %13 : vector<2x1024xf32>
    %16 = arith.addf %4, %15 : vector<2x1024xf32>
    %c1 = arith.constant 1 : index
    %17 = memref.load %arg2[%c1] : memref<6xf32, #tpu.memory_space<smem>>
    %c1_6 = arith.constant 1 : index
    %18 = memref.load %arg3[%c1_6] : memref<6xf32, #tpu.memory_space<smem>>
    %19 = vector.broadcast %17 : f32 to vector<2x1024xf32>
    %20 = arith.subf %3, %19 : vector<2x1024xf32>
    %cst_7 = arith.constant -5.000000e+00 : f32
    %cst_8 = arith.constant 5.000000e+00 : f32
    %21 = vector.broadcast %cst_7 : f32 to vector<2x1024xf32>
    %22 = arith.maximumf %21, %20 : vector<2x1024xf32>
    %23 = vector.broadcast %cst_8 : f32 to vector<2x1024xf32>
    %24 = arith.minimumf %23, %22 : vector<2x1024xf32>
    %25 = math.tanh %24 : vector<2x1024xf32>
    %26 = vector.broadcast %18 : f32 to vector<2x1024xf32>
    %27 = arith.mulf %26, %25 : vector<2x1024xf32>
    %28 = arith.addf %16, %27 : vector<2x1024xf32>
    %c2 = arith.constant 2 : index
    %29 = memref.load %arg2[%c2] : memref<6xf32, #tpu.memory_space<smem>>
    %c2_9 = arith.constant 2 : index
    %30 = memref.load %arg3[%c2_9] : memref<6xf32, #tpu.memory_space<smem>>
    %31 = vector.broadcast %29 : f32 to vector<2x1024xf32>
    %32 = arith.subf %3, %31 : vector<2x1024xf32>
    %cst_10 = arith.constant -5.000000e+00 : f32
    %cst_11 = arith.constant 5.000000e+00 : f32
    %33 = vector.broadcast %cst_10 : f32 to vector<2x1024xf32>
    %34 = arith.maximumf %33, %32 : vector<2x1024xf32>
    %35 = vector.broadcast %cst_11 : f32 to vector<2x1024xf32>
    %36 = arith.minimumf %35, %34 : vector<2x1024xf32>
    %37 = math.tanh %36 : vector<2x1024xf32>
    %38 = vector.broadcast %30 : f32 to vector<2x1024xf32>
    %39 = arith.mulf %38, %37 : vector<2x1024xf32>
    %40 = arith.addf %28, %39 : vector<2x1024xf32>
    %c3 = arith.constant 3 : index
    %41 = memref.load %arg2[%c3] : memref<6xf32, #tpu.memory_space<smem>>
    %c3_12 = arith.constant 3 : index
    %42 = memref.load %arg3[%c3_12] : memref<6xf32, #tpu.memory_space<smem>>
    %43 = vector.broadcast %41 : f32 to vector<2x1024xf32>
    %44 = arith.subf %3, %43 : vector<2x1024xf32>
    %cst_13 = arith.constant -5.000000e+00 : f32
    %cst_14 = arith.constant 5.000000e+00 : f32
    %45 = vector.broadcast %cst_13 : f32 to vector<2x1024xf32>
    %46 = arith.maximumf %45, %44 : vector<2x1024xf32>
    %47 = vector.broadcast %cst_14 : f32 to vector<2x1024xf32>
    %48 = arith.minimumf %47, %46 : vector<2x1024xf32>
    %49 = math.tanh %48 : vector<2x1024xf32>
    %50 = vector.broadcast %42 : f32 to vector<2x1024xf32>
    %51 = arith.mulf %50, %49 : vector<2x1024xf32>
    %52 = arith.addf %40, %51 : vector<2x1024xf32>
    %c4 = arith.constant 4 : index
    %53 = memref.load %arg2[%c4] : memref<6xf32, #tpu.memory_space<smem>>
    %c4_15 = arith.constant 4 : index
    %54 = memref.load %arg3[%c4_15] : memref<6xf32, #tpu.memory_space<smem>>
    %55 = vector.broadcast %53 : f32 to vector<2x1024xf32>
    %56 = arith.subf %3, %55 : vector<2x1024xf32>
    %cst_16 = arith.constant -5.000000e+00 : f32
    %cst_17 = arith.constant 5.000000e+00 : f32
    %57 = vector.broadcast %cst_16 : f32 to vector<2x1024xf32>
    %58 = arith.maximumf %57, %56 : vector<2x1024xf32>
    %59 = vector.broadcast %cst_17 : f32 to vector<2x1024xf32>
    %60 = arith.minimumf %59, %58 : vector<2x1024xf32>
    %61 = math.tanh %60 : vector<2x1024xf32>
    %62 = vector.broadcast %54 : f32 to vector<2x1024xf32>
    %63 = arith.mulf %62, %61 : vector<2x1024xf32>
    %64 = arith.addf %52, %63 : vector<2x1024xf32>
    %c5 = arith.constant 5 : index
    %65 = memref.load %arg2[%c5] : memref<6xf32, #tpu.memory_space<smem>>
    %c5_18 = arith.constant 5 : index
    %66 = memref.load %arg3[%c5_18] : memref<6xf32, #tpu.memory_space<smem>>
    %67 = vector.broadcast %65 : f32 to vector<2x1024xf32>
    %68 = arith.subf %3, %67 : vector<2x1024xf32>
    %cst_19 = arith.constant -5.000000e+00 : f32
    %cst_20 = arith.constant 5.000000e+00 : f32
    %69 = vector.broadcast %cst_19 : f32 to vector<2x1024xf32>
    %70 = arith.maximumf %69, %68 : vector<2x1024xf32>
    %71 = vector.broadcast %cst_20 : f32 to vector<2x1024xf32>
    %72 = arith.minimumf %71, %70 : vector<2x1024xf32>
    %73 = math.tanh %72 : vector<2x1024xf32>
    %74 = vector.broadcast %66 : f32 to vector<2x1024xf32>
    %75 = arith.mulf %74, %73 : vector<2x1024xf32>
    %76 = arith.addf %64, %75 : vector<2x1024xf32>
    %c1_21 = arith.constant 1 : index
    %77 = memref.load %arg1[%c1_21] : memref<2xf32, #tpu.memory_space<smem>>
    %78 = vector.broadcast %77 : f32 to vector<2x1024xf32>
    %79 = arith.addf %76, %78 : vector<2x1024xf32>
    %c0_22 = arith.constant 0 : index
    %c0_23 = arith.constant 0 : index
    %80 = vector.load %arg5[%c0_22, %c0_23] : memref<2x1024xf32, #tpu.memory_space<vmem>>, vector<2x1024xf32>
    tpu.vector_store %arg5[%c0_22, %c0_23], %79 {strides = array<i32>} : memref<2x1024xf32, #tpu.memory_space<vmem>>, vector<2x1024xf32>,
    return
  }
  func.func @transform_0(%arg0: i32) -> i32 {
    %c0_i32 = arith.constant 0 : i32
    %c0_i32_0 = arith.constant 0 : i32
    return %c0_i32 : i32
  }
  func.func @transform_1(%arg0: i32) -> i32 {
    %c0_i32 = arith.constant 0 : i32
    %c0_i32_0 = arith.constant 0 : i32
    return %c0_i32 : i32
  }
  func.func @transform_2(%arg0: i32) -> i32 {
    %c0_i32 = arith.constant 0 : i32
    %c0_i32_0 = arith.constant 0 : i32
    return %c0_i32 : i32
  }
  func.func @transform_3(%arg0: i32) -> (i32, i32) {
    %c0_i32 = arith.constant 0 : i32
    %c0_i32_0 = arith.constant 0 : i32
    return %arg0, %c0_i32 : i32, i32
  }
  func.func @transform_4(%arg0: i32) -> (i32, i32) {
    %c0_i32 = arith.constant 0 : i32
    %c0_i32_0 = arith.constant 0 : i32
    return %arg0, %c0_i32 : i32, i32
  }
}

</mosaic_0001>

<llo_original>
// kernel: tpu_custom_call.1
$region0: #{tpu_custom_call.1}
  #allocation0 [shape = 'u32[]', space=smem, size = 0x4, offset = 0x4, fixed_abs, tag = 'smem constant byte address 0x4 - core index']
  #allocation1 [shape = 'u32[144,128]{1,0:T(1,128)}', space=vmem, size = 0x12000, scoped, tag = 'internal scratch']
  %s0 = inlined_call_operand.hbm [shape: f32[2], index: 0, kind: input, shape index: {}]
  %s1 = inlined_call_operand.vmem [shape: f32[6], index: 1, kind: input, shape index: {}]
  %s2 = inlined_call_operand.vmem [shape: f32[6], index: 2, kind: input, shape index: {}]
  %s3 = inlined_call_operand.hbm [shape: f32[2,1024], index: 3, kind: input, shape index: {}]
  %s4 = inlined_call_operand.hbm [shape: f32[2,1024], index: 4, kind: output, shape index: {}]
  %s5 = sld [smem:[#allocation0]]
  $region42: #{tpu_custom_call.1} parent=0
    _
  %s7 = ssub.s32 1, %s5
  %s8 = scalar_select 0, %s7, %s5
  $region1: #{tpu_custom_call.1} parent=0
    #allocation2 [shape = 'u8[512]{0}', space=smem, size = 0x200, scoped, tag = 'input window, operand 0, single buffered']
    #allocation3 [shape = 's32[1]{0}', space=sflag, size = 0x4, scoped, tag = 'scoped memory for tpu_custom_call.1']
    #allocation4 [shape = 's32[1]{0}', space=sflag, size = 0x4, scoped, tag = 'scoped memory for tpu_custom_call.1']
    #allocation5 [shape = 's32[1]{0}', space=sflag, size = 0x4, scoped, tag = 'scoped memory for tpu_custom_call.1']
    #allocation6 [shape = 's32[1]{0}', space=sflag, size = 0x4, scoped, tag = 'scoped memory for tpu_custom_call.1']
    #allocation7 [shape = 'u8[512]{0}', space=smem, size = 0x200, scoped, tag = 'input window, operand 1, single buffered']
    #allocation8 [shape = 'u8[512]{0}', space=smem, size = 0x200, scoped, tag = 'input window, operand 2, single buffered']
    #allocation9 [shape = 's32[1]{0}', space=sflag, size = 0x4, scoped, tag = 'scoped memory for tpu_custom_call.1']
    #allocation10 [shape = 'u8[8192]{0}', space=vmem, size = 0x2000, scoped, tag = 'input window, operand 3, single buffered']
    #allocation11 [shape = 'u8[8192]{0}', space=vmem, size = 0x2000, scoped, tag = 'output window, operand 0, single buffered']
    %9 = vsyncpa [#allocation5], 0
    %10 = vsyncpa [#allocation6], 0
    %11 = vsyncpa [#allocation9], 0
    %12 = vsyncpa [#allocation3], 0
    %13 = vsyncpa [#allocation4], 0
    // Predicated region
    $region2: #{tpu_custom_call.1} parent=1 // pred_check
      _
    $region3: #{tpu_custom_call.1} parent=1 // pred_check_branch
      %15 = sbr.rel (0) target = $region5
    $region4: #{tpu_custom_call.1} parent=1 // pred_region
      %s17 = ssub.s32 16, 16
      %18 = vsyncadd [#allocation5], %s17
      %21 = dma.hbm_to_smem %s0, 16, [#allocation2], [#allocation5]
    $region5: #{tpu_custom_call.1} parent=1 // pred_fallthru
      _
    // Predicated region
    $region6: #{tpu_custom_call.1} parent=1 // pred_check
      _
    $region7: #{tpu_custom_call.1} parent=1 // pred_check_branch
      %23 = sbr.rel (0) target = $region9
    $region8: #{tpu_custom_call.1} parent=1 // pred_region
      %s25 = ssub.s32 16, 16
      %26 = vsyncadd [#allocation6], %s25
      %s28 = sshll.u32 %s1, 4
      %s29 = int_to_ptr.vmem [resolvable:$true] %s28
      %31 = dma.vmem_to_smem %s29, 16, [#allocation7], [#allocation6]
    $region9: #{tpu_custom_call.1} parent=1 // pred_fallthru
      _
    // Predicated region
    $region10: #{tpu_custom_call.1} parent=1 // pred_check
      _
    $region11: #{tpu_custom_call.1} parent=1 // pred_check_branch
      %33 = sbr.rel (0) target = $region13
    $region12: #{tpu_custom_call.1} parent=1 // pred_region
      %s35 = ssub.s32 16, 16
      %36 = vsyncadd [#allocation9], %s35
      %s38 = sshll.u32 %s2, 4
      %s39 = int_to_ptr.vmem [resolvable:$true] %s38
      %41 = dma.vmem_to_smem %s39, 16, [#allocation8], [#allocation9]
    $region13: #{tpu_custom_call.1} parent=1 // pred_fallthru
      _
    // Predicated region
    $region14: #{tpu_custom_call.1} parent=1 // pred_check
      _
    $region15: #{tpu_custom_call.1} parent=1 // pred_check_branch
      %43 = sbr.rel (0) target = $region17
    $region16: #{tpu_custom_call.1} parent=1 // pred_region
      %s45 = ssub.s32 256, 256
      %46 = vsyncadd [#allocation3], %s45
      %s48 = sshll.u32 [#allocation10], 4
      %s49 = int_to_ptr.vmem [resolvable:$true] %s48
      %51 = dma.hbm_to_vmem [thread:$0]  %s3, 256, %s49, [#allocation3]
    $region17: #{tpu_custom_call.1} parent=1 // pred_fallthru
      _
    // Predicated region
    $region18: #{tpu_custom_call.1} parent=1 // pred_check
      _
    $region19: #{tpu_custom_call.1} parent=1 // pred_check_branch
      %53 = sbr.rel (0) target = $region21
    $region20: #{tpu_custom_call.1} parent=1 // pred_region
      %54 = dma.done [#allocation5], 16
    $region21: #{tpu_custom_call.1} parent=1 // pred_fallthru
      _
    // Predicated region
    $region22: #{tpu_custom_call.1} parent=1 // pred_check
      _
    $region23: #{tpu_custom_call.1} parent=1 // pred_check_branch
      %56 = sbr.rel (0) target = $region25
    $region24: #{tpu_custom_call.1} parent=1 // pred_region
      %57 = dma.done [#allocation6], 16
    $region25: #{tpu_custom_call.1} parent=1 // pred_fallthru
      _
    // Predicated region
    $region26: #{tpu_custom_call.1} parent=1 // pred_check
      _
    $region27: #{tpu_custom_call.1} parent=1 // pred_check_branch
      %59 = sbr.rel (0) target = $region29
    $region28: #{tpu_custom_call.1} parent=1 // pred_region
      %60 = dma.done [#allocation9], 16
    $region29: #{tpu_custom_call.1} parent=1 // pred_fallthru
      _
    // Predicated region
    $region30: #{tpu_custom_call.1} parent=1 // pred_check
      _
    $region31: #{tpu_custom_call.1} parent=1 // pred_check_branch
      %62 = sbr.rel (0) target = $region33
    $region32: #{tpu_custom_call.1} parent=1 // pred_region
      %63 = dma.done [#allocation3], 256
    $region33: #{tpu_custom_call.1} parent=1 // pred_fallthru
      _
    %64 = sfence
    %v65 = vld [vmem:[#allocation10] sm:$0xff]
    %v66 = vld [vmem:[#allocation10 + $0x8] sm:$0xff]
    %s67 = sld [smem:[#allocation2]]
    %v68 = vstv %s67
    %v69 = vmul.f32 %v65, %v68
    %v70 = vmul.f32 %v66, %v68
    %s71 = sld [smem:[#allocation7]]
    %s72 = sld [smem:[#allocation8]]
    %v73 = vstv %s71
    %v74 = vsub.f32 %v69, %v73
    %v75 = vsub.f32 %v70, %v73
    %v76 = vmax.f32 %v74, -5.0
    %v77 = vmax.f32 %v75, -5.0
    %v78 = vmin.f32 %v76, 5.0
    %v79 = vmin.f32 %v77, 5.0
    %v80 = vtanh.pop %v78
    %v81 = vtanh.pop %v79
    %v82 = vstv %s72
    %v83 = vmul.f32 %v82, %v80
    %v84 = vmul.f32 %v82, %v81
    %v85 = vadd.f32 %v83, 0.0
    %v86 = vadd.f32 %v84, 0.0
    %s87 = sld [smem:[#allocation7 + $0x1]]
    %s88 = sld [smem:[#allocation8 + $0x1]]
    %v89 = vstv %s87
    %v90 = vsub.f32 %v69, %v89
    %v91 = vsub.f32 %v70, %v89
    %v92 = vmax.f32 %v90, -5.0
    %v93 = vmax.f32 %v91, -5.0
    %v94 = vmin.f32 %v92, 5.0
    %v95 = vmin.f32 %v93, 5.0
    %v96 = vtanh.pop %v94
    %v97 = vtanh.pop %v95
    %v98 = vstv %s88
    %v99 = vmul.f32 %v98, %v96
    %v100 = vmul.f32 %v98, %v97
    %v101 = vadd.f32 %v85, %v99
    %v102 = vadd.f32 %v86, %v100
    %s103 = sld [smem:[#allocation7 + $0x2]]
    %s104 = sld [smem:[#allocation8 + $0x2]]
    %v105 = vstv %s103
    %v106 = vsub.f32 %v69, %v105
    %v107 = vsub.f32 %v70, %v105
    %v108 = vmax.f32 %v106, -5.0
    %v109 = vmax.f32 %v107, -5.0
    %v110 = vmin.f32 %v108, 5.0
    %v111 = vmin.f32 %v109, 5.0
    %v112 = vtanh.pop %v110
    %v113 = vtanh.pop %v111
    %v114 = vstv %s104
    %v115 = vmul.f32 %v114, %v112
    %v116 = vmul.f32 %v114, %v113
    %v117 = vadd.f32 %v101, %v115
    %v118 = vadd.f32 %v102, %v116
    %s119 = sld [smem:[#allocation7 + $0x3]]
    %s120 = sld [smem:[#allocation8 + $0x3]]
    %v121 = vstv %s119
    %v122 = vsub.f32 %v69, %v121
    %v123 = vsub.f32 %v70, %v121
    %v124 = vmax.f32 %v122, -5.0
    %v125 = vmax.f32 %v123, -5.0
    %v126 = vmin.f32 %v124, 5.0
    %v127 = vmin.f32 %v125, 5.0
    %v128 = vtanh.pop %v126
    %v129 = vtanh.pop %v127
    %v130 = vstv %s120
    %v131 = vmul.f32 %v130, %v128
    %v132 = vmul.f32 %v130, %v129
    %v133 = vadd.f32 %v117, %v131
    %v134 = vadd.f32 %v118, %v132
    %s135 = sld [smem:[#allocation7 + $0x4]]
    %s136 = sld [smem:[#allocation8 + $0x4]]
    %v137 = vstv %s135
    %v138 = vsub.f32 %v69, %v137
    %v139 = vsub.f32 %v70, %v137
    %v140 = vmax.f32 %v138, -5.0
    %v141 = vmax.f32 %v139, -5.0
    %v142 = vmin.f32 %v140, 5.0
    %v143 = vmin.f32 %v141, 5.0
    %v144 = vtanh.pop %v142
    %v145 = vtanh.pop %v143
    %v146 = vstv %s136
    %v147 = vmul.f32 %v146, %v144
    %v148 = vmul.f32 %v146, %v145
    %v149 = vadd.f32 %v133, %v147
    %v150 = vadd.f32 %v134, %v148
    %s151 = sld [smem:[#allocation7 + $0x5]]
    %s152 = sld [smem:[#allocation8 + $0x5]]
    %v153 = vstv %s151
    %v154 = vsub.f32 %v69, %v153
    %v155 = vsub.f32 %v70, %v153
    %v156 = vmax.f32 %v154, -5.0
    %v157 = vmax.f32 %v155, -5.0
    %v158 = vmin.f32 %v156, 5.0
    %v159 = vmin.f32 %v157, 5.0
    %v160 = vtanh.pop %v158
    %v161 = vtanh.pop %v159
    %v162 = vstv %s152
    %v163 = vmul.f32 %v162, %v160
    %v164 = vmul.f32 %v162, %v161
    %v165 = vadd.f32 %v149, %v163
    %v166 = vadd.f32 %v150, %v164
    %s167 = sld [smem:[#allocation2 + $0x1]]
    %v168 = vstv %s167
    %v169 = vadd.f32 %v165, %v168
    %v170 = vadd.f32 %v166, %v168
    %171 = vst [vmem:[#allocation11] sm:$0xff] %v169
    %172 = vst [vmem:[#allocation11 + $0x8] sm:$0xff] %v170
    // Predicated region
    $region34: #{tpu_custom_call.1} parent=1 // pred_check
      _
    $region35: #{tpu_custom_call.1} parent=1 // pred_check_branch
      %174 = sbr.rel (0) target = $region37
    $region36: #{tpu_custom_call.1} parent=1 // pred_region
      %s176 = ssub.s32 256, 256
      %177 = vsyncadd [#allocation4], %s176
      %s179 = sshll.u32 [#allocation11], 4
      %s180 = int_to_ptr.vmem [resolvable:$true] %s179
      %182 = dma.vmem_to_hbm [thread:$0]  %s180, 256, %s4, [#allocation4]
    $region37: #{tpu_custom_call.1} parent=1 // pred_fallthru
      _
    // Predicated region
    $region38: #{tpu_custom_call.1} parent=1 // pred_check
      _
    $region39: #{tpu_custom_call.1} parent=1 // pred_check_branch
      %184 = sbr.rel (0) target = $region41
    $region40: #{tpu_custom_call.1} parent=1 // pred_region
      %185 = dma.done [#allocation4], 256
    $region41: #{tpu_custom_call.1} parent=1 // pred_fallthru
      _
    %186 = vsyncpa [#allocation3], 1
    %187 = vsyncpa [#allocation4], 1
    %188 = vsyncpa [#allocation5], 1
    %189 = vsyncpa [#allocation6], 1
    %190 = vsyncpa [#allocation9], 1

</llo_original>
